<compile_context>
chip_gen: v7x
topology: tpu7x:2x2x1
jax: 0.10.0
libtpu: 0.0.40
codegen_flags: <defaults>
</compile_context>

<pallas_src>
import jax
import jax.numpy as jnp
from jax.experimental import pallas as pl
from jax.experimental.pallas import tpu as pltpu


def _round_up(x, m):
    return (x + m - 1) // m * m


def _wvdn_kernel(q_ref, w_ref, g_ref, o_ref):
    # q_ref, w_ref: (tile_m, 128*N) lane-dense input tiles
    # g_ref:        (128*N, 128) constant 0/1 group-sum matrix (constant block
    #               index -> fetched once). dtype = bf16 for 16-bit float
    #               inputs (single-pass MXU), else f32 (exact sum).
    # o_ref:        (tile_m, 128) lane-dense output tile (one sum per (b,t)).
    r = q_ref[...].astype(jnp.float32) * w_ref[...].astype(jnp.float32)
    s = jnp.dot(r.astype(g_ref.dtype), g_ref[...],
                preferred_element_type=jnp.float32)
    o_ref[...] = s.astype(o_ref.dtype)


def _wvdn_main(q2, w2, out_dtype, target_block_bytes):
    """Kernel path for the first R_main rows (R_main % 128 == 0)."""
    R_main, N = q2.shape
    LANES = 128 * N
    M = R_main // 128                      # lane-rows of 128 (b,t) groups

    # Free (row-major) reshape: each lane-row holds 128 whole agent groups.
    q2d = q2.reshape(M, LANES)
    w2d = w2.reshape(M, LANES)

    in_dt = jnp.result_type(q2.dtype, w2.dtype)
    use_bf16_dot = (jnp.issubdtype(in_dt, jnp.floating)
                    and jnp.dtype(in_dt).itemsize <= 2)
    dot_dtype = jnp.bfloat16 if use_bf16_dot else jnp.float32

    # gmat[l, j] = 1 iff lane l belongs to group j (l // N == j).
    gmat = (jnp.arange(LANES)[:, None] // N
            == jnp.arange(128)[None, :]).astype(dot_dtype)

    itemsize = jnp.dtype(in_dt).itemsize
    min_itemsize = min(jnp.dtype(q2.dtype).itemsize,
                       jnp.dtype(w2.dtype).itemsize,
                       jnp.dtype(out_dtype).itemsize)
    sub = 8 * max(1, 4 // min_itemsize)    # native sublane multiple (8/16/32)

    # ~target_block_bytes per streaming input block.
    tile_m = target_block_bytes // (LANES * itemsize)
    tile_m = max(sub, (tile_m // sub) * sub)
    # Keep >= 2 grid steps when possible so v7x's two TensorCores both run.
    tile_m = min(tile_m, max(sub, _round_up(pl.cdiv(M, 2), sub)))
    if tile_m >= M:
        tile_m = M                         # single full block (always legal)
    grid_m = pl.cdiv(M, tile_m)            # ragged last block: OOB rows only
                                           # feed OOB output rows, which are
                                           # masked on writeback.

    out_itemsize = jnp.dtype(out_dtype).itemsize
    flops = 2 * M * LANES * 128 + M * LANES
    bytes_accessed = (M * LANES * (jnp.dtype(q2.dtype).itemsize
                                   + jnp.dtype(w2.dtype).itemsize)
                      + M * 128 * out_itemsize
                      + LANES * 128 * jnp.dtype(dot_dtype).itemsize)

    out2d = pl.pallas_call(
        _wvdn_kernel,
        out_shape=jax.ShapeDtypeStruct((M, 128), out_dtype),
        grid=(grid_m,),
        in_specs=[
            pl.BlockSpec((tile_m, LANES), lambda i: (i, 0)),
            pl.BlockSpec((tile_m, LANES), lambda i: (i, 0)),
            # Constant block index -> DMA'd once, stays VMEM-resident.
            # TODO(synk): pl.Buffered(1) would drop its second buffer
            # (<= 1 MiB); skipped since VMEM headroom is ample at 2 MiB tiles.
            pl.BlockSpec((LANES, 128), lambda i: (0, 0)),
        ],
        out_specs=pl.BlockSpec((tile_m, 128), lambda i: (i, 0)),
        compiler_params=pltpu.CompilerParams(
            dimension_semantics=("parallel",),
            vmem_limit_bytes=32 * 1024 * 1024,
        ),
        cost_estimate=pl.CostEstimate(
            flops=int(flops),
            transcendentals=0,
            bytes_accessed=int(bytes_accessed)),
    )(q2d, w2d, gmat)

    # (M, 128) flattens back to the original (b*T + t) row order.
    return out2d.reshape(R_main)


def weighted_vdn(q_values, weights, *, target_block_bytes=2 << 20):
    """ret[b, t, 0] = sum_a q_values[b, t, a] * weights[b, t, a]."""
    assert q_values.shape == weights.shape
    B, T, N = q_values.shape
    out_dtype = jnp.result_type(q_values.dtype, weights.dtype)

    R = B * T
    R_main = (R // 128) * 128

    # Fewer than 128 (b,t) rows: launch-overhead dominated, plain XLA wins.
    # TODO(synk): in production fuse this op into the adjacent mixing /
    # TD-loss kernel instead of running a standalone pallas_call at toy sizes.
    if R_main == 0:
        return jnp.sum(q_values * weights, axis=2,
                       keepdims=True).astype(out_dtype)

    q2 = q_values.reshape(R, N)
    w2 = weights.reshape(R, N)

    if R_main == R:
        # Common aligned case: zero extra HBM traffic (no pad, no slice).
        out_flat = _wvdn_main(q2, w2, out_dtype, target_block_bytes)
    else:
        # Ragged remainder (< 128 rows): kernel on the aligned prefix, tiny
        # jnp epilogue for the tail (cheaper than padding both full inputs).
        out_main = _wvdn_main(q2[:R_main], w2[:R_main], out_dtype,
                              target_block_bytes)
        tail = jnp.sum(q2[R_main:] * w2[R_main:], axis=-1).astype(out_dtype)
        out_flat = jnp.concatenate([out_main, tail])

    return out_flat.reshape(B, T, 1)


if __name__ == "__main__":
    # WeightedVDNNet has no parameters — deterministic example inputs only.
    key = jax.random.PRNGKey(0)
    kq, kw = jax.random.split(key)

    # [batch, timesteps, n_agents]; R = B*T = 256 exercises the zero-copy
    # aligned kernel path.
    B, T, N = 2, 128, 4
    q_values = jax.random.normal(kq, (B, T, N), dtype=jnp.float32)
    weights = jax.random.uniform(kw, (B, T, N), dtype=jnp.float32)

    out = jax.block_until_ready(weighted_vdn(q_values, weights))
    ref = jnp.sum(q_values * weights, axis=2, keepdims=True)
    assert out.shape == (B, T, 1), out.shape
    assert jnp.allclose(out, ref, atol=1e-5, rtol=1e-5), "mismatch vs reference"

    # Ragged case: kernel on the aligned 128-row prefix + jnp tail, odd N.
    k2q, k2w = jax.random.split(jax.random.PRNGKey(1))
    B2, T2, N2 = 3, 60, 5                  # R = 180 -> 128 via kernel + 52 tail
    q2 = jax.random.normal(k2q, (B2, T2, N2), dtype=jnp.float32)
    w2 = jax.random.uniform(k2w, (B2, T2, N2), dtype=jnp.float32)
    out2 = jax.block_until_ready(weighted_vdn(q2, w2))
    ref2 = jnp.sum(q2 * w2, axis=2, keepdims=True)
    assert out2.shape == (B2, T2, 1), out2.shape
    assert jnp.allclose(out2, ref2, atol=1e-5, rtol=1e-5), "mismatch (ragged)"

    # bf16 inputs: exercises the single-pass bf16 MXU dot (f32 accumulation).
    k3q, k3w = jax.random.split(jax.random.PRNGKey(2))
    q3 = jax.random.normal(k3q, (2, 128, 4), dtype=jnp.bfloat16)
    w3 = jax.random.uniform(k3w, (2, 128, 4), dtype=jnp.bfloat16)
    out3 = jax.block_until_ready(weighted_vdn(q3, w3))
    ref3 = jnp.sum(q3.astype(jnp.float32) * w3.astype(jnp.float32),
                   axis=2, keepdims=True)
    assert out3.shape == (2, 128, 1), out3.shape
    assert jnp.allclose(out3.astype(jnp.float32), ref3, atol=1e-1), \
        "mismatch (bf16 case)"

    print("KERNEL_OK")
</pallas_src>

<mosaic_0001>
module attributes {stable_mosaic.version = 11 : i64} {
  func.func @_wvdn_kernel(%arg0: i32, %arg1: memref<2x512xf32, #tpu.memory_space<vmem>>, %arg2: memref<2x512xf32, #tpu.memory_space<vmem>>, %arg3: memref<512x128xf32, #tpu.memory_space<vmem>>, %arg4: memref<2x128xf32, #tpu.memory_space<vmem>>) attributes {dimension_semantics = [#tpu.dimension_semantics<parallel>], iteration_bounds = array<i64: 1>, scalar_prefetch = 0 : i64, scratch_operands = 0 : i64, tpu.core_type = #tpu.core_type<tc>, window_params = [{transform_indices = @transform_0, window_bounds = array<i64: 2, 512>}, {transform_indices = @transform_1, window_bounds = array<i64: 2, 512>}, {pipeline_mode = #tpu.pipeline_mode<synchronous>, transform_indices = @transform_2, window_bounds = array<i64: 512, 128>}, {transform_indices = @transform_3, window_bounds = array<i64: 2, 128>}]} {
    %c0 = arith.constant 0 : index
    %c0_0 = arith.constant 0 : index
    %0 = vector.load %arg1[%c0, %c0_0] : memref<2x512xf32, #tpu.memory_space<vmem>>, vector<2x512xf32>
    %c0_1 = arith.constant 0 : index
    %c0_2 = arith.constant 0 : index
    %1 = vector.load %arg2[%c0_1, %c0_2] : memref<2x512xf32, #tpu.memory_space<vmem>>, vector<2x512xf32>
    %2 = arith.mulf %0, %1 : vector<2x512xf32>
    %c0_3 = arith.constant 0 : index
    %c0_4 = arith.constant 0 : index
    %3 = vector.load %arg3[%c0_3, %c0_4] : memref<512x128xf32, #tpu.memory_space<vmem>>, vector<512x128xf32>
    %cst = arith.constant dense<0.000000e+00> : vector<2x128xf32>
    %4 = tpu.matmul %2, %3, %cst {dimension_numbers = #tpu.dot_dimension_numbers<[1], [0], [0], [1], [0, 0, 1, 1], [], []>} : vector<2x512xf32>, vector<512x128xf32>, vector<2x128xf32> -> vector<2x128xf32>
    %c0_5 = arith.constant 0 : index
    %c0_6 = arith.constant 0 : index
    %5 = vector.load %arg4[%c0_5, %c0_6] : memref<2x128xf32, #tpu.memory_space<vmem>>, vector<2x128xf32>
    tpu.vector_store %arg4[%c0_5, %c0_6], %4 {strides = array<i32>} : memref<2x128xf32, #tpu.memory_space<vmem>>, vector<2x128xf32>,
    return
  }
  func.func @transform_0(%arg0: i32) -> (i32, i32) {
    %c0_i32 = arith.constant 0 : i32
    %c0_i32_0 = arith.constant 0 : i32
    return %arg0, %c0_i32 : i32, i32
  }
  func.func @transform_1(%arg0: i32) -> (i32, i32) {
    %c0_i32 = arith.constant 0 : i32
    %c0_i32_0 = arith.constant 0 : i32
    return %arg0, %c0_i32 : i32, i32
  }
  func.func @transform_2(%arg0: i32) -> (i32, i32) {
    %c0_i32 = arith.constant 0 : i32
    %c0_i32_0 = arith.constant 0 : i32
    %c0_i32_1 = arith.constant 0 : i32
    return %c0_i32, %c0_i32_0 : i32, i32
  }
  func.func @transform_3(%arg0: i32) -> (i32, i32) {
    %c0_i32 = arith.constant 0 : i32
    %c0_i32_0 = arith.constant 0 : i32
    return %arg0, %c0_i32 : i32, i32
  }
}

</mosaic_0001>

<llo_original>
// kernel: tpu_custom_call.1
$region0: #{tpu_custom_call.1}
  #allocation0 [shape = 'u32[]', space=smem, size = 0x4, offset = 0x4, fixed_abs, tag = 'smem constant byte address 0x4 - core index']
  #allocation1 [shape = 'u32[144,128]{1,0:T(1,128)}', space=vmem, size = 0x12000, scoped, tag = 'internal scratch']
  %s0 = inlined_call_operand.hbm [shape: f32[2,512], index: 0, kind: input, shape index: {}]
  %s1 = inlined_call_operand.hbm [shape: f32[2,512], index: 1, kind: input, shape index: {}]
  %s2 = inlined_call_operand.hbm [shape: f32[512,128], index: 2, kind: input, shape index: {}]
  %s3 = inlined_call_operand.hbm [shape: f32[2,128], index: 3, kind: output, shape index: {}]
  %s4 = sld [smem:[#allocation0]]
  $region34: #{tpu_custom_call.1} parent=0
    _
  %s6 = ssub.s32 1, %s4
  %s7 = scalar_select 0, %s6, %s4
  $region1: #{tpu_custom_call.1} parent=0
    #allocation2 [shape = 'u8[4096]{0}', space=vmem, size = 0x1000, scoped, tag = 'input window, operand 0, single buffered']
    #allocation3 [shape = 's32[1]{0}', space=sflag, size = 0x4, scoped, tag = 'scoped memory for tpu_custom_call.1']
    #allocation4 [shape = 's32[1]{0}', space=sflag, size = 0x4, scoped, tag = 'scoped memory for tpu_custom_call.1']
    #allocation5 [shape = 'u8[4096]{0}', space=vmem, size = 0x1000, scoped, tag = 'input window, operand 1, single buffered']
    #allocation6 [shape = 's32[1]{0}', space=sflag, size = 0x4, scoped, tag = 'scoped memory for tpu_custom_call.1']
    #allocation7 [shape = 'u8[262144]{0}', space=vmem, size = 0x40000, scoped, tag = 'input window, operand 2, single buffered']
    #allocation8 [shape = 'u8[1024]{0}', space=vmem, size = 0x400, scoped, tag = 'output window, operand 0, single buffered']
    %8 = vsyncpa [#allocation3], 0
    %9 = vsyncpa [#allocation6], 0
    %10 = vsyncpa [#allocation4], 0
    // Predicated region
    $region2: #{tpu_custom_call.1} parent=1 // pred_check
      _
    $region3: #{tpu_custom_call.1} parent=1 // pred_check_branch
      %12 = sbr.rel (0) target = $region5
    $region4: #{tpu_custom_call.1} parent=1 // pred_region
      %s14 = ssub.s32 128, 128
      %15 = vsyncadd [#allocation3], %s14
      %s17 = sshll.u32 [#allocation2], 4
      %s18 = int_to_ptr.vmem [resolvable:$true] %s17
      %20 = dma.hbm_to_vmem [thread:$0]  %s0, 128, %s18, [#allocation3]
    $region5: #{tpu_custom_call.1} parent=1 // pred_fallthru
      _
    // Predicated region
    $region6: #{tpu_custom_call.1} parent=1 // pred_check
      _
    $region7: #{tpu_custom_call.1} parent=1 // pred_check_branch
      %22 = sbr.rel (0) target = $region9
    $region8: #{tpu_custom_call.1} parent=1 // pred_region
      %s24 = ssub.s32 128, 128
      %25 = vsyncadd [#allocation6], %s24
      %s27 = sshll.u32 [#allocation5], 4
      %s28 = int_to_ptr.vmem [resolvable:$true] %s27
      %30 = dma.hbm_to_vmem [thread:$0]  %s1, 128, %s28, [#allocation6]
    $region9: #{tpu_custom_call.1} parent=1 // pred_fallthru
      _
    // Predicated region
    $region10: #{tpu_custom_call.1} parent=1 // pred_check
      _
    $region11: #{tpu_custom_call.1} parent=1 // pred_check_branch
      %32 = sbr.rel (0) target = $region13
    $region12: #{tpu_custom_call.1} parent=1 // pred_region
      %s34 = ssub.s32 8192, 8192
      %35 = vsyncadd [#allocation6], %s34
      %s36 = sshll.u32 [#allocation7], 4
      %s37 = int_to_ptr.vmem [resolvable:$true] %s36
      %42 = dma.hbm_to_vmem [thread:$0]  %s2, 8192, %s37, [#allocation6], 128, 128, 8
    $region13: #{tpu_custom_call.1} parent=1 // pred_fallthru
      _
    // Predicated region
    $region14: #{tpu_custom_call.1} parent=1 // pred_check
      _
    $region15: #{tpu_custom_call.1} parent=1 // pred_check_branch
      %44 = sbr.rel (0) target = $region17
    $region16: #{tpu_custom_call.1} parent=1 // pred_region
      %45 = dma.done [#allocation3], 128
    $region17: #{tpu_custom_call.1} parent=1 // pred_fallthru
      _
    // Predicated region
    $region18: #{tpu_custom_call.1} parent=1 // pred_check
      _
    $region19: #{tpu_custom_call.1} parent=1 // pred_check_branch
      %47 = sbr.rel (0) target = $region21
    $region20: #{tpu_custom_call.1} parent=1 // pred_region
      %48 = dma.done [#allocation6], 128
    $region21: #{tpu_custom_call.1} parent=1 // pred_fallthru
      _
    // Predicated region
    $region22: #{tpu_custom_call.1} parent=1 // pred_check
      _
    $region23: #{tpu_custom_call.1} parent=1 // pred_check_branch
      %50 = sbr.rel (0) target = $region25
    $region24: #{tpu_custom_call.1} parent=1 // pred_region
      %51 = dma.done [#allocation6], 8192
    $region25: #{tpu_custom_call.1} parent=1 // pred_fallthru
      _
    %v52 = vld [vmem:[#allocation2] sm:$0xff]
    %v53 = vld [vmem:[#allocation5] sm:$0xff]
    %v54 = vmul.f32 %v52, %v53
    %v55 = vld [vmem:[#allocation7] sm:$0xff]
    %v56 = vld [vmem:[#allocation7 + $0x8] sm:$0xff]
    %v57 = vld [vmem:[#allocation7 + $0x10] sm:$0xff]
    %v58 = vld [vmem:[#allocation7 + $0x18] sm:$0xff]
    %v59 = vld [vmem:[#allocation7 + $0x20] sm:$0xff]
    %v60 = vld [vmem:[#allocation7 + $0x28] sm:$0xff]
    %v61 = vld [vmem:[#allocation7 + $0x30] sm:$0xff]
    %v62 = vld [vmem:[#allocation7 + $0x38] sm:$0xff]
    %v63 = vld [vmem:[#allocation7 + $0x40] sm:$0xff]
    %v64 = vld [vmem:[#allocation7 + $0x48] sm:$0xff]
    %v65 = vld [vmem:[#allocation7 + $0x50] sm:$0xff]
    %v66 = vld [vmem:[#allocation7 + $0x58] sm:$0xff]
    %v67 = vld [vmem:[#allocation7 + $0x60] sm:$0xff]
    %v68 = vld [vmem:[#allocation7 + $0x68] sm:$0xff]
    %v69 = vld [vmem:[#allocation7 + $0x70] sm:$0xff]
    %v70 = vld [vmem:[#allocation7 + $0x78] sm:$0xff]
    %v71 = vld [vmem:[#allocation7 + $0x80] sm:$0xff]
    %v72 = vld [vmem:[#allocation7 + $0x88] sm:$0xff]
    %v73 = vld [vmem:[#allocation7 + $0x90] sm:$0xff]
    %v74 = vld [vmem:[#allocation7 + $0x98] sm:$0xff]
    %v75 = vld [vmem:[#allocation7 + $0xa0] sm:$0xff]
    %v76 = vld [vmem:[#allocation7 + $0xa8] sm:$0xff]
    %v77 = vld [vmem:[#allocation7 + $0xb0] sm:$0xff]
    %v78 = vld [vmem:[#allocation7 + $0xb8] sm:$0xff]
    %v79 = vld [vmem:[#allocation7 + $0xc0] sm:$0xff]
    %v80 = vld [vmem:[#allocation7 + $0xc8] sm:$0xff]
    %v81 = vld [vmem:[#allocation7 + $0xd0] sm:$0xff]
    %v82 = vld [vmem:[#allocation7 + $0xd8] sm:$0xff]
    %v83 = vld [vmem:[#allocation7 + $0xe0] sm:$0xff]
    %v84 = vld [vmem:[#allocation7 + $0xe8] sm:$0xff]
    %v85 = vld [vmem:[#allocation7 + $0xf0] sm:$0xff]
    %v86 = vld [vmem:[#allocation7 + $0xf8] sm:$0xff]
    %v87 = vld [vmem:[#allocation7 + $0x100] sm:$0xff]
    %v88 = vld [vmem:[#allocation7 + $0x108] sm:$0xff]
    %v89 = vld [vmem:[#allocation7 + $0x110] sm:$0xff]
    %v90 = vld [vmem:[#allocation7 + $0x118] sm:$0xff]
    %v91 = vld [vmem:[#allocation7 + $0x120] sm:$0xff]
    %v92 = vld [vmem:[#allocation7 + $0x128] sm:$0xff]
    %v93 = vld [vmem:[#allocation7 + $0x130] sm:$0xff]
    %v94 = vld [vmem:[#allocation7 + $0x138] sm:$0xff]
    %v95 = vld [vmem:[#allocation7 + $0x140] sm:$0xff]
    %v96 = vld [vmem:[#allocation7 + $0x148] sm:$0xff]
    %v97 = vld [vmem:[#allocation7 + $0x150] sm:$0xff]
    %v98 = vld [vmem:[#allocation7 + $0x158] sm:$0xff]
    %v99 = vld [vmem:[#allocation7 + $0x160] sm:$0xff]
    %v100 = vld [vmem:[#allocation7 + $0x168] sm:$0xff]
    %v101 = vld [vmem:[#allocation7 + $0x170] sm:$0xff]
    %v102 = vld [vmem:[#allocation7 + $0x178] sm:$0xff]
    %v103 = vld [vmem:[#allocation7 + $0x180] sm:$0xff]
    %v104 = vld [vmem:[#allocation7 + $0x188] sm:$0xff]
    %v105 = vld [vmem:[#allocation7 + $0x190] sm:$0xff]
    %v106 = vld [vmem:[#allocation7 + $0x198] sm:$0xff]
    %v107 = vld [vmem:[#allocation7 + $0x1a0] sm:$0xff]
    %v108 = vld [vmem:[#allocation7 + $0x1a8] sm:$0xff]
    %v109 = vld [vmem:[#allocation7 + $0x1b0] sm:$0xff]
    %v110 = vld [vmem:[#allocation7 + $0x1b8] sm:$0xff]
    %v111 = vld [vmem:[#allocation7 + $0x1c0] sm:$0xff]
    %v112 = vld [vmem:[#allocation7 + $0x1c8] sm:$0xff]
    %v113 = vld [vmem:[#allocation7 + $0x1d0] sm:$0xff]
    %v114 = vld [vmem:[#allocation7 + $0x1d8] sm:$0xff]
    %v115 = vld [vmem:[#allocation7 + $0x1e0] sm:$0xff]
    %v116 = vld [vmem:[#allocation7 + $0x1e8] sm:$0xff]
    %v117 = vld [vmem:[#allocation7 + $0x1f0] sm:$0xff]
    %v118 = vld [vmem:[#allocation7 + $0x1f8] sm:$0xff]
    %v120 = vcombine.high %v54, %v54
    %v122 = vunpack.c.l.s4 1983009808
    %v123 = vunpack.c.0.s8 %v122
    %v124 = vlaneseq
    %v125 = vshrl.u32 %v124, 7
    %v126 = vsub.s32 %v123, %v125
    %v127 = vrot.slane %v54, %v126
    %v129 = vunpack.c.l.s4 1983009808
    %v130 = vunpack.c.0.s8 %v129
    %v131 = vlaneseq
    %v132 = vshrl.u32 %v131, 7
    %v133 = vsub.s32 %v130, %v132
    %v134 = vrot.slane %v120, %v133
    %v135 = vcombine.high %v127, %v127
    %v136 = vcombine.high %v134, %v134
    %141 = vmatprep.subr.mxu0 0.0
    %142 = vmatpush1.msra.mxu0 %v55
    %143 = vmatprep.subr.mxu0 0.0
    %144 = vmatpush1.msra.mxu0 %v56
    %145 = vmatprep.subr.mxu0 0.0
    %146 = vmatpush1.msra.mxu0 %v57
    %147 = vmatprep.subr.mxu0 0.0
    %148 = vmatpush1.msra.mxu0 %v58
    %149 = vmatprep.subr.mxu0 0.0
    %150 = vmatpush1.msra.mxu0 %v59
    %151 = vmatprep.subr.mxu0 0.0
    %152 = vmatpush1.msra.mxu0 %v60
    %153 = vmatprep.subr.mxu0 0.0
    %154 = vmatpush1.msra.mxu0 %v61
    %155 = vmatprep.subr.mxu0 0.0
    %156 = vmatpush1.msra.mxu0 %v62
    %157 = vmatprep.subr.mxu0 0.0
    %158 = vmatpush1.msra.mxu0 %v63
    %159 = vmatprep.subr.mxu0 0.0
    %160 = vmatpush1.msra.mxu0 %v64
    %161 = vmatprep.subr.mxu0 0.0
    %162 = vmatpush1.msra.mxu0 %v65
    %163 = vmatprep.subr.mxu0 0.0
    %164 = vmatpush1.msra.mxu0 %v66
    %165 = vmatprep.subr.mxu0 0.0
    %166 = vmatpush1.msra.mxu0 %v67
    %167 = vmatprep.subr.mxu0 0.0
    %168 = vmatpush1.msra.mxu0 %v68
    %169 = vmatprep.subr.mxu0 0.0
    %170 = vmatpush1.msra.mxu0 %v69
    %171 = vmatprep.subr.mxu0 0.0
    %172 = vmatpush1.msra.mxu0 %v70
    %173 = vmatprep.subr.mxu0 0.0
    %174 = vmatpush1.msra.mxu0 %v71
    %175 = vmatprep.subr.mxu0 0.0
    %176 = vmatpush1.msra.mxu0 %v72
    %177 = vmatprep.subr.mxu0 0.0
    %178 = vmatpush1.msra.mxu0 %v73
    %179 = vmatprep.subr.mxu0 0.0
    %180 = vmatpush1.msra.mxu0 %v74
    %181 = vmatprep.subr.mxu0 0.0
    %182 = vmatpush1.msra.mxu0 %v75
    %183 = vmatprep.subr.mxu0 0.0
    %184 = vmatpush1.msra.mxu0 %v76
    %185 = vmatprep.subr.mxu0 0.0
    %186 = vmatpush1.msra.mxu0 %v77
    %187 = vmatprep.subr.mxu0 0.0
    %188 = vmatpush1.msra.mxu0 %v78
    %189 = vmatprep.subr.mxu0 0.0
    %190 = vmatpush1.msra.mxu0 %v79
    %191 = vmatprep.subr.mxu0 0.0
    %192 = vmatpush1.msra.mxu0 %v80
    %193 = vmatprep.subr.mxu0 0.0
    %194 = vmatpush1.msra.mxu0 %v81
    %195 = vmatprep.subr.mxu0 0.0
    %196 = vmatpush1.msra.mxu0 %v82
    %197 = vmatprep.subr.mxu0 0.0
    %198 = vmatpush1.msra.mxu0 %v83
    %199 = vmatprep.subr.mxu0 0.0
    %200 = vmatpush1.msra.mxu0 %v84
    %201 = vmatprep.subr.mxu0 0.0
    %202 = vmatpush1.msra.mxu0 %v85
    %203 = vmatprep.subr.mxu0 0.0
    %204 = vmatpush1.msra.mxu0 %v86
    %205 = vmatprep.mubr.f32.mxu0 %v135
    %206 = vmatmul.mubr.f32.gmra.mrb[0].mxu0 %v127
    %v207 = vpop.f32.mrb[0].mxu0
    %v208 = vadd.f32 0.0, %v207
    %v209 = vpop.f32.mrb[0].mxu0
    %210 = vdwg.mxu0
    %211 = vmatprep.subr.mxu0 0.0
    %212 = vmatpush1.msra.mxu0 %v87
    %213 = vmatprep.subr.mxu0 0.0
    %214 = vmatpush1.msra.mxu0 %v88
    %215 = vmatprep.subr.mxu0 0.0
    %216 = vmatpush1.msra.mxu0 %v89
    %217 = vmatprep.subr.mxu0 0.0
    %218 = vmatpush1.msra.mxu0 %v90
    %219 = vmatprep.subr.mxu0 0.0
    %220 = vmatpush1.msra.mxu0 %v91
    %221 = vmatprep.subr.mxu0 0.0
    %222 = vmatpush1.msra.mxu0 %v92
    %223 = vmatprep.subr.mxu0 0.0
    %224 = vmatpush1.msra.mxu0 %v93
    %225 = vmatprep.subr.mxu0 0.0
    %226 = vmatpush1.msra.mxu0 %v94
    %227 = vmatprep.subr.mxu0 0.0
    %228 = vmatpush1.msra.mxu0 %v95
    %229 = vmatprep.subr.mxu0 0.0
    %230 = vmatpush1.msra.mxu0 %v96
    %231 = vmatprep.subr.mxu0 0.0
    %232 = vmatpush1.msra.mxu0 %v97
    %233 = vmatprep.subr.mxu0 0.0
    %234 = vmatpush1.msra.mxu0 %v98
    %235 = vmatprep.subr.mxu0 0.0
    %236 = vmatpush1.msra.mxu0 %v99
    %237 = vmatprep.subr.mxu0 0.0
    %238 = vmatpush1.msra.mxu0 %v100
    %239 = vmatprep.subr.mxu0 0.0
    %240 = vmatpush1.msra.mxu0 %v101
    %241 = vmatprep.subr.mxu0 0.0
    %242 = vmatpush1.msra.mxu0 %v102
    %243 = vmatprep.subr.mxu0 0.0
    %244 = vmatpush1.msra.mxu0 %v103
    %245 = vmatprep.subr.mxu0 0.0
    %246 = vmatpush1.msra.mxu0 %v104
    %247 = vmatprep.subr.mxu0 0.0
    %248 = vmatpush1.msra.mxu0 %v105
    %249 = vmatprep.subr.mxu0 0.0
    %250 = vmatpush1.msra.mxu0 %v106
    %251 = vmatprep.subr.mxu0 0.0
    %252 = vmatpush1.msra.mxu0 %v107
    %253 = vmatprep.subr.mxu0 0.0
    %254 = vmatpush1.msra.mxu0 %v108
    %255 = vmatprep.subr.mxu0 0.0
    %256 = vmatpush1.msra.mxu0 %v109
    %257 = vmatprep.subr.mxu0 0.0
    %258 = vmatpush1.msra.mxu0 %v110
    %259 = vmatprep.subr.mxu0 0.0
    %260 = vmatpush1.msra.mxu0 %v111
    %261 = vmatprep.subr.mxu0 0.0
    %262 = vmatpush1.msra.mxu0 %v112
    %263 = vmatprep.subr.mxu0 0.0
    %264 = vmatpush1.msra.mxu0 %v113
    %265 = vmatprep.subr.mxu0 0.0
    %266 = vmatpush1.msra.mxu0 %v114
    %267 = vmatprep.subr.mxu0 0.0
    %268 = vmatpush1.msra.mxu0 %v115
    %269 = vmatprep.subr.mxu0 0.0
    %270 = vmatpush1.msra.mxu0 %v116
    %271 = vmatprep.subr.mxu0 0.0
    %272 = vmatpush1.msra.mxu0 %v117
    %273 = vmatprep.subr.mxu0 0.0
    %274 = vmatpush1.msra.mxu0 %v118
    %275 = vmatprep.mubr.f32.mxu0 %v136
    %276 = vmatmul.mubr.f32.gmra.mrb[0].mxu0 %v134
    %v277 = vpop.f32.mrb[0].mxu0
    %v278 = vadd.f32 %v208, %v277
    %v279 = vpop.f32.mrb[0].mxu0
    %280 = vdwg.mxu0
    %281 = vst [vmem:[#allocation8] sm:$0x3] %v278
    // Predicated region
    $region26: #{tpu_custom_call.1} parent=1 // pred_check
      _
    $region27: #{tpu_custom_call.1} parent=1 // pred_check_branch
      %283 = sbr.rel (0) target = $region29
    $region28: #{tpu_custom_call.1} parent=1 // pred_region
      %s285 = ssub.s32 32, 32
      %286 = vsyncadd [#allocation4], %s285
      %s288 = sshll.u32 [#allocation8], 4
      %s289 = int_to_ptr.vmem [resolvable:$true] %s288
      %291 = dma.vmem_to_hbm [thread:$0]  %s289, 32, %s3, [#allocation4]
    $region29: #{tpu_custom_call.1} parent=1 // pred_fallthru
      _
    // Predicated region
    $region30: #{tpu_custom_call.1} parent=1 // pred_check
      _
    $region31: #{tpu_custom_call.1} parent=1 // pred_check_branch
      %293 = sbr.rel (0) target = $region33
    $region32: #{tpu_custom_call.1} parent=1 // pred_region
      %294 = dma.done [#allocation4], 32
    $region33: #{tpu_custom_call.1} parent=1 // pred_fallthru
      _
    %295 = vsyncpa [#allocation3], 1
    %296 = vsyncpa [#allocation6], 1
    %297 = vsyncpa [#allocation4], 1

</llo_original>
